<compile_context>
chip_gen: v7x
topology: tpu7x:2x2x1
jax: 0.10.0
libtpu: 0.0.40
codegen_flags: <defaults>
</compile_context>

<pallas_src>
import functools

import jax
import jax.numpy as jnp
from jax.experimental import pallas as pl
from jax.experimental.pallas import tpu as pltpu


def _masked_sse_kernel(x_ref, y_ref, m_ref, out_ref, *, rows_total, tile_rows,
                       ragged):
    """One (batch, spatial-tile) step of sum((x - y)^2 * mask).

    x_ref/y_ref: (1, C, tile_rows, 128) image/label block.
    m_ref      : (1, 1, tile_rows, 128) int8 mask block (broadcast over C).
    out_ref    : (1, acc_rows, 128) f32 per-batch partial accumulator.
    """
    j = pl.program_id(1)

    x = x_ref[0].astype(jnp.float32)          # (C, tile_rows, 128)
    y = y_ref[0].astype(jnp.float32)          # (C, tile_rows, 128)
    keep = m_ref[0] != 0                      # (1, tile_rows, 128) bool

    if ragged:
        # The last spatial tile may extend past the real number of 128-lane
        # rows; zero it with a select (a multiply could propagate NaN/Inf
        # garbage from the undefined part of the edge block).
        row_ids = jax.lax.broadcasted_iota(jnp.int32, (1, tile_rows, 128), 1)
        keep = keep & (row_ids + j * tile_rows < rows_total)

    d = x - y
    v = jnp.where(keep, d * d, 0.0)           # (C, tile_rows, 128), mask bcast over C

    c = v.shape[0]
    if tile_rows % 8 == 0:
        # Dense path: fold channels+rows into whole (8,128) tiles and reduce
        # along the leading axis (pure VALU adds, no XLU) to a single vreg.
        partial_sum = v.reshape(c * tile_rows // 8, 8, 128).sum(axis=0)
    else:
        # Tiny-spatial corner case (single tile): reduce over channels only.
        partial_sum = v.sum(axis=0)           # (tile_rows, 128)

    @pl.when(j == 0)
    def _():
        out_ref[0] = partial_sum

    @pl.when(j != 0)
    def _():
        out_ref[0] += partial_sum


def masked_pixel_reconstruct_loss(image, label, mask_location, *,
                                  max_tile_rows=1024):
    """image, label: (N, C, H, W); mask_location: (N, H, W) bool."""
    N, C, H, W = image.shape
    assert label.shape == image.shape
    assert mask_location.shape == (N, H, W)

    K = H * W
    x = image.reshape(N, C, K)
    y = label.reshape(N, C, K)
    m = mask_location.reshape(N, 1, K)

    if K % 128 != 0:
        # TODO(synk): mask the ragged lane tail in-kernel instead of paying a
        # full HBM pad copy of image/label for 128-unaligned spatial sizes.
        pad = (-K) % 128
        x = jnp.pad(x, ((0, 0), (0, 0), (0, pad)))
        y = jnp.pad(y, ((0, 0), (0, 0), (0, pad)))
        m = jnp.pad(m, ((0, 0), (0, 0), (0, pad)))   # pad mask with False
        K += pad

    R = K // 128                                     # 128-lane rows per (n, c)
    x = x.reshape(N, C, R, 128)
    y = y.reshape(N, C, R, 128)
    m = m.reshape(N, 1, R, 128).astype(jnp.int8)

    esize = jnp.dtype(image.dtype).itemsize

    # --- per-generation VMEM budget (128 MiB on v5e/v6e, 64 MiB/TC on v7x) ---
    try:
        vmem_cap = int(pltpu.get_tpu_info().vmem_capacity_bytes)
    except Exception:
        vmem_cap = 64 * 1024 * 1024
    vmem_limit = int(min(vmem_cap * 5 // 8, 64 * 1024 * 1024))    # v7x: 40 MiB
    block_budget = int(min(vmem_cap * 3 // 8, 32 * 1024 * 1024))  # v7x: 24 MiB

    # VMEM bytes per 128-lane row of one spatial tile:
    #   image+label blocks (double-buffered) + int8 mask (double-buffered,
    #   counted at 4 B/elem to cover (32,128) int8 sublane padding) + f32
    #   elementwise intermediate / cast headroom.
    per_row = 4 * C * 128 * esize + 2 * 4 * 128 + 3 * C * 128 * 4
    rows_budget = max(8, block_budget // per_row)
    tile_rows = max(8, (min(rows_budget, max_tile_rows) // 8) * 8)

    if R <= tile_rows:
        tile_rows = R               # single tile; full-dim block legal for any R
        num_tiles = 1
    else:
        num_tiles = pl.cdiv(R, tile_rows)
    ragged = (num_tiles * tile_rows != R)
    acc_rows = 8 if tile_rows % 8 == 0 else tile_rows

    img_spec = pl.BlockSpec((1, C, tile_rows, 128), lambda n, j: (n, 0, j, 0))
    msk_spec = pl.BlockSpec((1, 1, tile_rows, 128), lambda n, j: (n, 0, j, 0))
    out_spec = pl.BlockSpec((1, acc_rows, 128), lambda n, j: (n, 0, 0))

    cost = pl.CostEstimate(
        flops=int(4 * N * C * R * 128),
        transcendentals=0,
        bytes_accessed=int(2 * N * C * R * 128 * esize + N * R * 128
                           + N * acc_rows * 128 * 4),
    )

    partials = pl.pallas_call(
        functools.partial(_masked_sse_kernel, rows_total=R,
                          tile_rows=tile_rows, ragged=ragged),
        out_shape=jax.ShapeDtypeStruct((N, acc_rows, 128), jnp.float32),
        grid_spec=pltpu.PrefetchScalarGridSpec(
            num_scalar_prefetch=0,
            grid=(N, num_tiles),
            in_specs=[img_spec, img_spec, msk_spec],
            out_specs=out_spec,
        ),
        compiler_params=pltpu.CompilerParams(
            dimension_semantics=("parallel", "arbitrary"),
            vmem_limit_bytes=vmem_limit,
        ),
        cost_estimate=cost,
    )(x, y, m)

    # Denominator: C * popcount(mask) as a tiny fused XLA reduce over the bool
    # mask. An all-False mask yields 0/0 -> NaN, matching torch .mean() on an
    # empty selection.
    denom = C * jnp.sum(mask_location, dtype=jnp.float32)
    return jnp.sum(partials) / denom


def _reference(image, label, mask_location):
    mask_e = jnp.broadcast_to(mask_location[:, None, :, :], image.shape)
    d = image.astype(jnp.float32) - label.astype(jnp.float32)
    d2 = jnp.where(mask_e, d * d, 0.0)
    return jnp.sum(d2) / jnp.sum(mask_e.astype(jnp.float32))


if __name__ == "__main__":
    root = jax.random.PRNGKey(0)

    def run_case(idx, N, C, H, W, p, max_tile_rows=1024):
        k1, k2, k3 = jax.random.split(jax.random.fold_in(root, idx), 3)
        image = jax.random.normal(k1, (N, C, H, W), dtype=jnp.float32)
        label = jax.random.normal(k2, (N, C, H, W), dtype=jnp.float32)
        mask = jax.random.bernoulli(k3, p=p, shape=(N, H, W))
        out = jax.block_until_ready(
            masked_pixel_reconstruct_loss(image, label, mask,
                                          max_tile_rows=max_tile_rows))
        ref = _reference(image, label, mask)
        assert jnp.allclose(out, ref, rtol=1e-5, atol=1e-5), (idx, out, ref)

    run_case(0, 2, 4, 16, 16, 0.3)                      # spec shape, single tile
    run_case(1, 2, 3, 16, 16, 0.5)                      # C=3 channel broadcast
    run_case(2, 2, 4, 48, 48, 0.3, max_tile_rows=8)     # multi-tile + ragged tail
    run_case(3, 2, 4, 12, 12, 0.4)                      # 128-unaligned K (pad path)
    print("KERNEL_OK")
</pallas_src>

<mosaic_0001>
module attributes {stable_mosaic.version = 11 : i64} {
  func.func @_masked_sse_kernel(%arg0: i32, %arg1: i32, %arg2: memref<1x4x2x128xf32, #tpu.memory_space<vmem>>, %arg3: memref<1x4x2x128xf32, #tpu.memory_space<vmem>>, %arg4: memref<1x1x2x128xi8, #tpu.memory_space<vmem>>, %arg5: memref<1x2x128xf32, #tpu.memory_space<vmem>>) attributes {dimension_semantics = [#tpu.dimension_semantics<parallel>, #tpu.dimension_semantics<arbitrary>], iteration_bounds = array<i64: 2, 1>, scalar_prefetch = 0 : i64, scratch_operands = 0 : i64, tpu.core_type = #tpu.core_type<tc>, window_params = [{transform_indices = @transform_0, window_bounds = array<i64: 1, 4, 2, 128>}, {transform_indices = @transform_1, window_bounds = array<i64: 1, 4, 2, 128>}, {transform_indices = @transform_2, window_bounds = array<i64: 1, 1, 2, 128>}, {transform_indices = @transform_3, window_bounds = array<i64: 1, 2, 128>}]} {
    %c0 = arith.constant 0 : index
    %c0_0 = arith.constant 0 : index
    %c0_1 = arith.constant 0 : index
    %c0_2 = arith.constant 0 : index
    %0 = vector.load %arg2[%c0, %c0_0, %c0_1, %c0_2] : memref<1x4x2x128xf32, #tpu.memory_space<vmem>>, vector<1x4x2x128xf32>
    %1 = vector.shape_cast %0 : vector<1x4x2x128xf32> to vector<4x2x128xf32>
    %c0_3 = arith.constant 0 : index
    %c0_4 = arith.constant 0 : index
    %c0_5 = arith.constant 0 : index
    %c0_6 = arith.constant 0 : index
    %2 = vector.load %arg3[%c0_3, %c0_4, %c0_5, %c0_6] : memref<1x4x2x128xf32, #tpu.memory_space<vmem>>, vector<1x4x2x128xf32>
    %3 = vector.shape_cast %2 : vector<1x4x2x128xf32> to vector<4x2x128xf32>
    %c0_7 = arith.constant 0 : index
    %c0_8 = arith.constant 0 : index
    %c0_9 = arith.constant 0 : index
    %c0_10 = arith.constant 0 : index
    %4 = vector.load %arg4[%c0_7, %c0_8, %c0_9, %c0_10] : memref<1x1x2x128xi8, #tpu.memory_space<vmem>>, vector<1x1x2x128xi8>
    %5 = vector.shape_cast %4 : vector<1x1x2x128xi8> to vector<1x2x128xi8>
    %c0_i8 = arith.constant 0 : i8
    %6 = vector.broadcast %c0_i8 : i8 to vector<1x2x128xi8>
    %7 = arith.cmpi ne, %5, %6 : vector<1x2x128xi8>
    %8 = arith.subf %1, %3 : vector<4x2x128xf32>
    %9 = arith.mulf %8, %8 : vector<4x2x128xf32>
    %cst = arith.constant 0.000000e+00 : f32
    %10 = vector.shape_cast %7 : vector<1x2x128xi1> to vector<1x2x128xi1>
    %11 = vector.broadcast %10 : vector<1x2x128xi1> to vector<4x2x128xi1>
    %12 = vector.broadcast %cst : f32 to vector<4x2x128xf32>
    %13 = arith.select %11, %9, %12 : vector<4x2x128xi1>, vector<4x2x128xf32>
    %cst_11 = arith.constant dense<0.000000e+00> : vector<2x128xf32>
    %14 = vector.multi_reduction <add>, %13, %cst_11 [0] : vector<4x2x128xf32> to vector<2x128xf32>
    %c0_i32 = arith.constant 0 : i32
    %15 = arith.cmpi eq, %arg1, %c0_i32 : i32
    %16 = arith.extui %15 : i1 to i32
    %c0_i32_12 = arith.constant 0 : i32
    %17 = arith.cmpi ne, %16, %c0_i32_12 : i32
    scf.if %17 {
      %c0_15 = arith.constant 0 : index
      %c0_16 = arith.constant 0 : index
      %c0_17 = arith.constant 0 : index
      %21 = vector.load %arg5[%c0_15, %c0_16, %c0_17] : memref<1x2x128xf32, #tpu.memory_space<vmem>>, vector<1x2x128xf32>
      %22 = vector.shape_cast %21 : vector<1x2x128xf32> to vector<2x128xf32>
      %23 = vector.shape_cast %14 : vector<2x128xf32> to vector<1x2x128xf32>
      tpu.vector_store %arg5[%c0_15, %c0_16, %c0_17], %23 {strides = array<i32>} : memref<1x2x128xf32, #tpu.memory_space<vmem>>, vector<1x2x128xf32>,
    } else {
    }
    %c0_i32_13 = arith.constant 0 : i32
    %18 = arith.cmpi ne, %arg1, %c0_i32_13 : i32
    %19 = arith.extui %18 : i1 to i32
    %c0_i32_14 = arith.constant 0 : i32
    %20 = arith.cmpi ne, %19, %c0_i32_14 : i32
    scf.if %20 {
      %c0_15 = arith.constant 0 : index
      %c0_16 = arith.constant 0 : index
      %c0_17 = arith.constant 0 : index
      %21 = vector.load %arg5[%c0_15, %c0_16, %c0_17] : memref<1x2x128xf32, #tpu.memory_space<vmem>>, vector<1x2x128xf32>
      %22 = vector.shape_cast %21 : vector<1x2x128xf32> to vector<2x128xf32>
      %23 = arith.addf %22, %14 : vector<2x128xf32>
      %c0_18 = arith.constant 0 : index
      %c0_19 = arith.constant 0 : index
      %c0_20 = arith.constant 0 : index
      %24 = vector.load %arg5[%c0_18, %c0_19, %c0_20] : memref<1x2x128xf32, #tpu.memory_space<vmem>>, vector<1x2x128xf32>
      %25 = vector.shape_cast %24 : vector<1x2x128xf32> to vector<2x128xf32>
      %26 = vector.shape_cast %23 : vector<2x128xf32> to vector<1x2x128xf32>
      tpu.vector_store %arg5[%c0_18, %c0_19, %c0_20], %26 {strides = array<i32>} : memref<1x2x128xf32, #tpu.memory_space<vmem>>, vector<1x2x128xf32>,
    } else {
    }
    return
  }
  func.func @transform_0(%arg0: i32, %arg1: i32) -> (i32, i32, i32, i32) {
    %c0_i32 = arith.constant 0 : i32
    %c0_i32_0 = arith.constant 0 : i32
    %c0_i32_1 = arith.constant 0 : i32
    return %arg0, %c0_i32, %arg1, %c0_i32_0 : i32, i32, i32, i32
  }
  func.func @transform_1(%arg0: i32, %arg1: i32) -> (i32, i32, i32, i32) {
    %c0_i32 = arith.constant 0 : i32
    %c0_i32_0 = arith.constant 0 : i32
    %c0_i32_1 = arith.constant 0 : i32
    return %arg0, %c0_i32, %arg1, %c0_i32_0 : i32, i32, i32, i32
  }
  func.func @transform_2(%arg0: i32, %arg1: i32) -> (i32, i32, i32, i32) {
    %c0_i32 = arith.constant 0 : i32
    %c0_i32_0 = arith.constant 0 : i32
    %c0_i32_1 = arith.constant 0 : i32
    return %arg0, %c0_i32, %arg1, %c0_i32_0 : i32, i32, i32, i32
  }
  func.func @transform_3(%arg0: i32, %arg1: i32) -> (i32, i32, i32) {
    %c0_i32 = arith.constant 0 : i32
    %c0_i32_0 = arith.constant 0 : i32
    %c0_i32_1 = arith.constant 0 : i32
    return %arg0, %c0_i32, %c0_i32_0 : i32, i32, i32
  }
}

</mosaic_0001>

<llo_original>
// kernel: tpu_custom_call.1
$region0: #{tpu_custom_call.1}
  #allocation0 [shape = 'u32[]', space=smem, size = 0x4, offset = 0x4, fixed_abs, tag = 'smem constant byte address 0x4 - core index']
  #allocation1 [shape = 'u32[144,128]{1,0:T(1,128)}', space=vmem, size = 0x12000, scoped, tag = 'internal scratch']
  %s0 = inlined_call_operand.hbm [shape: f32[2,4,2,128], index: 0, kind: input, shape index: {}]
  %s1 = inlined_call_operand.hbm [shape: f32[2,4,2,128], index: 1, kind: input, shape index: {}]
  %s2 = inlined_call_operand.vmem [shape: s8[2,1,2,128], index: 2, kind: input, shape index: {}]
  %s3 = inlined_call_operand.hbm [shape: f32[2,2,128], index: 3, kind: output, shape index: {}]
  %s4 = sld [smem:[#allocation0]]
  $region61: #{tpu_custom_call.1} parent=0
    _
  %s6 = ssub.s32 1, %s4
  %s7 = scalar_select 0, %s6, %s4
  $region1: #{tpu_custom_call.1} parent=0
    #allocation2 [shape = 'u8[8192]{0}', space=vmem, size = 0x2000, scoped, tag = 'input window, operand 0']
    #allocation3 [shape = 's32[2]{0}', space=sflag, size = 0x8, scoped, tag = 'scoped memory for tpu_custom_call.1']
    #allocation4 [shape = 's32[2]{0}', space=sflag, size = 0x8, scoped, tag = 'scoped memory for tpu_custom_call.1']
    #allocation5 [shape = 'u8[8192]{0}', space=vmem, size = 0x2000, scoped, tag = 'input window, operand 1']
    #allocation6 [shape = 's32[2]{0}', space=sflag, size = 0x8, scoped, tag = 'scoped memory for tpu_custom_call.1']
    #allocation7 [shape = 'u8[2048]{0}', space=vmem, size = 0x800, scoped, tag = 'output window, operand 0']
    %8 = vsyncpa [#allocation3], 0
    %s9 = scalar_lea.sflag [#allocation3], 1
    %10 = vsyncpa %s9, 0
    %11 = vsyncpa [#allocation6], 0
    %s12 = scalar_lea.sflag [#allocation6], 1
    %13 = vsyncpa %s12, 0
    %14 = vsyncpa [#allocation4], 0
    %s15 = scalar_lea.sflag [#allocation4], 1
    %16 = vsyncpa %s15, 0
    loop: start=0, step=1, limit=4
    $region2: #{tpu_custom_call.1} parent=1 // loop_pre_header
      _
    $region3: #{tpu_custom_call.1} parent=1 // loop_header
      %s18 = sphi 0, %s22
      %p19 = scmp.ge.s32.totalorder %s18, 4
      %s25 = sphi 0, %s37
      %s26 = sphi 0, %s33
      %s27 = sphi 0, %s25
      %s28 = sphi 0, %s26
      %s29 = sphi 0, %s27
      %s30 = sphi 0, %s28
      %s42 = sphi 0, %s44
      %s45 = sphi 0, %s42
      %s46 = sphi 0, %s45
      %s62 = sphi 0, %s46
      %s70 = sphi 0, %s72
      %s73 = sphi 0, %s70
      %s74 = sphi 0, %s73
      %s90 = sphi 0, %s74
      %s98 = sphi 0, %s100
      %s101 = sphi 0, %s98
      %s102 = sphi 0, %s101
      %s118 = sphi 0, %s102
      %s124 = sphi 0, %s126
      %s127 = sphi 0, %s124
      %s128 = sphi 0, %s127
      %s144 = sphi 0, %s128
    $region4: #{tpu_custom_call.1} parent=1 // loop_header_branch
      %21 = sbr.rel (%p19) target = $region8
    $region5: #{tpu_custom_call.1} parent=1 // loop_body
      %s23 = ssub.s32 %s18, 1
      %s24 = ssub.s32 %s18, 2
      %s31 = sadd.s32 1, %s26
      %p32 = scmp.ge.s32.totalorder %s31, 1
      %s33 = scalar_select %p32, 0, %s31
      %s34 = sadd.s32 1, %s25
      %s35 = scalar_select %p32, %s34, %s25
      %p36 = scmp.ge.s32.totalorder %s35, 2
      %s37 = scalar_select %p36, 0, %s35
      %s38 = ssub.s32 %s25, %s37
      %s39 = ssub.s32 %s26, %s33
      %s40 = sor.u32 %s38, %s39
      %p41 = scmp.eq.s32.totalorder %s40, 0
      %s43 = sadd.s32 %s42, 1
      %s44 = scalar_select %p41, %s42, %s43
      %p47 = pneg %p41
      %p48 = scmp.eq.s32.totalorder %s18, 1
      %p49 = por %p47, %p48
      %p50 = scmp.ne.s32.totalorder %s42, %s45
      %p51 = scmp.eq.s32.totalorder %s18, 0
      %p52 = por %p50, %p51
      %p53 = scmp.ne.s32.totalorder %s42, %s45
      %p54 = scmp.eq.s32.totalorder %s23, 1
      %p55 = por %p53, %p54
      %p56 = scmp.ne.s32.totalorder %s45, %s46
      %p57 = scmp.eq.s32.totalorder %s23, 0
      %p58 = por %p56, %p57
      %p59 = scmp.ne.s32.totalorder %s45, %s46
      %p60 = scmp.eq.s32.totalorder %s24, 1
      %p61 = por %p59, %p60
      %p63 = scmp.ne.s32.totalorder %s46, %s62
      %p64 = scmp.eq.s32.totalorder %s24, 0
      %p65 = por %p63, %p64
      %s66 = ssub.s32 %s25, %s37
      %s67 = ssub.s32 %s26, %s33
      %s68 = sor.u32 %s66, %s67
      %p69 = scmp.eq.s32.totalorder %s68, 0
      %s71 = sadd.s32 %s70, 1
      %s72 = scalar_select %p69, %s70, %s71
      %p75 = pneg %p69
      %p76 = scmp.eq.s32.totalorder %s18, 1
      %p77 = por %p75, %p76
      %p78 = scmp.ne.s32.totalorder %s70, %s73
      %p79 = scmp.eq.s32.totalorder %s18, 0
      %p80 = por %p78, %p79
      %p81 = scmp.ne.s32.totalorder %s70, %s73
      %p82 = scmp.eq.s32.totalorder %s23, 1
      %p83 = por %p81, %p82
      %p84 = scmp.ne.s32.totalorder %s73, %s74
      %p85 = scmp.eq.s32.totalorder %s23, 0
      %p86 = por %p84, %p85
      %p87 = scmp.ne.s32.totalorder %s73, %s74
      %p88 = scmp.eq.s32.totalorder %s24, 1
      %p89 = por %p87, %p88
      %p91 = scmp.ne.s32.totalorder %s74, %s90
      %p92 = scmp.eq.s32.totalorder %s24, 0
      %p93 = por %p91, %p92
      %s94 = ssub.s32 %s25, %s37
      %s95 = ssub.s32 %s26, %s33
      %s96 = sor.u32 %s94, %s95
      %p97 = scmp.eq.s32.totalorder %s96, 0
      %s99 = sadd.s32 %s98, 1
      %s100 = scalar_select %p97, %s98, %s99
      %p103 = pneg %p97
      %p104 = scmp.eq.s32.totalorder %s18, 1
      %p105 = por %p103, %p104
      %p106 = scmp.ne.s32.totalorder %s98, %s101
      %p107 = scmp.eq.s32.totalorder %s18, 0
      %p108 = por %p106, %p107
      %p109 = scmp.ne.s32.totalorder %s98, %s101
      %p110 = scmp.eq.s32.totalorder %s23, 1
      %p111 = por %p109, %p110
      %p112 = scmp.ne.s32.totalorder %s101, %s102
      %p113 = scmp.eq.s32.totalorder %s23, 0
      %p114 = por %p112, %p113
      %p115 = scmp.ne.s32.totalorder %s101, %s102
      %p116 = scmp.eq.s32.totalorder %s24, 1
      %p117 = por %p115, %p116
      %p119 = scmp.ne.s32.totalorder %s102, %s118
      %p120 = scmp.eq.s32.totalorder %s24, 0
      %p121 = por %p119, %p120
      %s122 = ssub.s32 %s25, %s37
      %p123 = scmp.eq.s32.totalorder %s122, 0
      %s125 = sadd.s32 %s124, 1
      %s126 = scalar_select %p123, %s124, %s125
      %p129 = pneg %p123
      %p130 = scmp.eq.s32.totalorder %s18, 1
      %p131 = por %p129, %p130
      %p132 = scmp.ne.s32.totalorder %s124, %s127
      %p133 = scmp.eq.s32.totalorder %s18, 0
      %p134 = por %p132, %p133
      %p135 = scmp.ne.s32.totalorder %s124, %s127
      %p136 = scmp.eq.s32.totalorder %s23, 1
      %p137 = por %p135, %p136
      %p138 = scmp.ne.s32.totalorder %s127, %s128
      %p139 = scmp.eq.s32.totalorder %s23, 0
      %p140 = por %p138, %p139
      %p141 = scmp.ne.s32.totalorder %s127, %s128
      %p142 = scmp.eq.s32.totalorder %s24, 1
      %p143 = por %p141, %p142
      %p145 = scmp.ne.s32.totalorder %s128, %s144
      %p146 = scmp.eq.s32.totalorder %s24, 0
      %p147 = por %p145, %p146
      %p148 = scmp.le.s32.totalorder 1, %s18
      %p149 = scmp.lt.s32.totalorder %s18, 3
      %p150 = pnand %p148, %p149
      %p151 = pneg %p150
      // Predicated region
      $region9: #{tpu_custom_call.1} parent=5 // pred_check
        _
      $region10: #{tpu_custom_call.1} parent=5 // pred_check_branch
        %153 = sbr.rel (%p150) target = $region12
      $region11: #{tpu_custom_call.1} parent=5 // pred_region
        %s154 = ssub.s32 %s18, 1
      $region12: #{tpu_custom_call.1} parent=5 // pred_fallthru
        _
      %p155 = scmp.lt.s32.totalorder %s18, 2
      // Predicated region
      $region13: #{tpu_custom_call.1} parent=5 // pred_check
        %p156 = pneg %p155
      $region14: #{tpu_custom_call.1} parent=5 // pred_check_branch
        %158 = sbr.rel (%p156) target = $region16
      $region15: #{tpu_custom_call.1} parent=5 // pred_region
        // Predicated region
        $region17: #{tpu_custom_call.1} parent=15 // pred_check
          %p159 = pneg %p52
        $region18: #{tpu_custom_call.1} parent=15 // pred_check_branch
          %161 = sbr.rel (%p159) target = $region20
        $region19: #{tpu_custom_call.1} parent=15 // pred_region
          %s162 = sand.u32 %s42, 1
          %s163 = scalar_lea.sflag [#allocation3], %s162
          %s164 = sand.u32 %s42, 1
          %s165 = smul.addr %s164, 8
          %s166 = scalar_lea.vmem [#allocation2], %s165
          %s168 = ssub.s32 128, 128
          %169 = vsyncadd %s163, %s168
          %s170 = smul.addr %s25, 4
          %s171 = sadd.s32 %s26, %s170
          %s172 = smul.addr %s171, 32
          %s173 = scalar_lea.hbm %s0, %s172
          %s174 = sshll.u32 %s166, 4
          %s175 = int_to_ptr.vmem [resolvable:$true] %s174
          %180 = dma.hbm_to_vmem [thread:$0]  %s173, 128, %s175, %s163, 32, 32, 2
        $region20: #{tpu_custom_call.1} parent=15 // pred_fallthru
          _
        // Predicated region
        $region21: #{tpu_custom_call.1} parent=15 // pred_check
          %p181 = pneg %p80
        $region22: #{tpu_custom_call.1} parent=15 // pred_check_branch
          %183 = sbr.rel (%p181) target = $region24
        $region23: #{tpu_custom_call.1} parent=15 // pred_region
          %s184 = sand.u32 %s70, 1
          %s185 = scalar_lea.sflag [#allocation6], %s184
          %s186 = sand.u32 %s70, 1
          %s187 = smul.addr %s186, 8
          %s188 = scalar_lea.vmem [#allocation5], %s187
          %s190 = ssub.s32 128, 128
          %191 = vsyncadd %s185, %s190
          %s192 = smul.addr %s25, 4
          %s193 = sadd.s32 %s26, %s192
          %s194 = smul.addr %s193, 32
          %s195 = scalar_lea.hbm %s1, %s194
          %s196 = sshll.u32 %s188, 4
          %s197 = int_to_ptr.vmem [resolvable:$true] %s196
          %202 = dma.hbm_to_vmem [thread:$0]  %s195, 128, %s197, %s185, 32, 32, 2
        $region24: #{tpu_custom_call.1} parent=15 // pred_fallthru
          _
        // Predicated region
        $region25: #{tpu_custom_call.1} parent=15 // pred_check
          %p203 = pneg %p108
        $region26: #{tpu_custom_call.1} parent=15 // pred_check_branch
          %205 = sbr.rel (%p203) target = $region28
        $region27: #{tpu_custom_call.1} parent=15 // pred_region
          %p206 = scmp.lt.s32.totalorder %s25, 1
          %s207 = scalar_select %p206, %s25, 1
          %p208 = scmp.lt.s32.totalorder %s26, 0
          %s209 = scalar_select %p208, %s26, 0
          %s210 = sadd.s32 %s209, %s207
          %s211 = scalar_lea.vmem %s2, %s210
        $region28: #{tpu_custom_call.1} parent=15 // pred_fallthru
          _
      $region16: #{tpu_custom_call.1} parent=5 // pred_fallthru
        _
      %p212 = scmp.le.s32.totalorder 1, %s18
      %p213 = scmp.lt.s32.totalorder %s18, 3
      %p214 = pnand %p212, %p213
      %p215 = pneg %p214
      // Predicated region
      $region29: #{tpu_custom_call.1} parent=5 // pred_check
        _
      $region30: #{tpu_custom_call.1} parent=5 // pred_check_branch
        %217 = sbr.rel (%p214) target = $region32
      $region31: #{tpu_custom_call.1} parent=5 // pred_region
        %s218 = ssub.s32 %s18, 1
        %s219 = sand.u32 %s45, 1
        %s220 = scalar_lea.sflag [#allocation3], %s219
        %s221 = sand.u32 %s45, 1
        %s222 = smul.addr %s221, 8
        %s223 = scalar_lea.vmem [#allocation2], %s222
        // Predicated region
        $region33: #{tpu_custom_call.1} parent=31 // pred_check
          %p224 = pneg %p58
        $region34: #{tpu_custom_call.1} parent=31 // pred_check_branch
          %226 = sbr.rel (%p224) target = $region36
        $region35: #{tpu_custom_call.1} parent=31 // pred_region
          %227 = dma.done %s220, 128
        $region36: #{tpu_custom_call.1} parent=31 // pred_fallthru
          _
        %s228 = sand.u32 %s73, 1
        %s229 = scalar_lea.sflag [#allocation6], %s228
        %s230 = sand.u32 %s73, 1
        %s231 = smul.addr %s230, 8
        %s232 = scalar_lea.vmem [#allocation5], %s231
        // Predicated region
        $region37: #{tpu_custom_call.1} parent=31 // pred_check
          %p233 = pneg %p86
        $region38: #{tpu_custom_call.1} parent=31 // pred_check_branch
          %235 = sbr.rel (%p233) target = $region40
        $region39: #{tpu_custom_call.1} parent=31 // pred_region
          %236 = dma.done %s229, 128
        $region40: #{tpu_custom_call.1} parent=31 // pred_fallthru
          _
        %s237 = sand.u32 %s45, 1
        %s238 = scalar_lea.sflag [#allocation3], %s237
        %s239 = sand.u32 %s45, 1
        %s240 = smul.addr %s239, 8
        %s241 = scalar_lea.vmem [#allocation2], %s240
        %p242 = pneg %p58
        %p243 = pneg %p55
        %s244 = sand.u32 %s73, 1
        %s245 = scalar_lea.sflag [#allocation6], %s244
        %s246 = sand.u32 %s73, 1
        %s247 = smul.addr %s246, 8
        %s248 = scalar_lea.vmem [#allocation5], %s247
        %p249 = pneg %p86
        %p250 = pneg %p83
        %p251 = scmp.lt.s32.totalorder %s27, 1
        %s252 = scalar_select %p251, %s27, 1
        %p253 = scmp.lt.s32.totalorder %s28, 0
        %s254 = scalar_select %p253, %s28, 0
        %s255 = sadd.s32 %s254, %s252
        %s256 = scalar_lea.vmem %s2, %s255
        %p257 = pneg %p114
        %p258 = pneg %p111
        %p259 = pneg %p140
        %p260 = pneg %p137
        %s261 = sand.u32 %s127, 1
        %s262 = scalar_lea.sflag [#allocation4], %s261
        %s263 = sand.u32 %s127, 1
        %s264 = smul.addr %s263, 2
        %s265 = scalar_lea.vmem [#allocation7], %s264
        %p266 = scmp.lt.s32.totalorder %s27, 1
        %s267 = scalar_select %p266, %s27, 1
        %p268 = scmp.lt.s32.totalorder %s28, 0
        %s269 = scalar_select %p268, %s28, 0
        %s270 = sadd.s32 %s269, %s267
        %s271 = scalar_lea.vmem %s2, %s270
        %v274 = vld [vmem:[%s223] sm:$0x3]
        %v275 = vld [vmem:[%s223 + $0x2] sm:$0x3]
        %v276 = vld [vmem:[%s223 + $0x4] sm:$0x3]
        %v277 = vld [vmem:[%s223 + $0x6] sm:$0x3]
        %v278 = vld [vmem:[%s232] sm:$0x3]
        %v279 = vld [vmem:[%s232 + $0x2] sm:$0x3]
        %v280 = vld [vmem:[%s232 + $0x4] sm:$0x3]
        %v281 = vld [vmem:[%s232 + $0x6] sm:$0x3]
        %v282 = vld [vmem:[%s271] sm:$0x1]
        %vm283 = vnez %v282
        %v284 = vsub.f32 %v274, %v278
        %v285 = vsub.f32 %v275, %v279
        %v286 = vsub.f32 %v276, %v280
        %v287 = vsub.f32 %v277, %v281
        %v288 = vmul.f32 %v284, %v284
        %v289 = vmul.f32 %v285, %v285
        %v290 = vmul.f32 %v286, %v286
        %v291 = vmul.f32 %v287, %v287
        %v292 = vsel %vm283, 16843009, 0
        %v293 = vunpack.c.0.s8 %v292
        %vm294 = vcmp.ne.s32.totalorder %v293, 0
        %v295 = vsel %vm294, 1, 0
        %vm296 = vcmp.eq.s32.totalorder %v295, 1
        %v297 = vsel %vm296, %v288, 0.0
        %v298 = vsel %vm296, %v289, 0.0
        %v299 = vsel %vm296, %v290, 0.0
        %v300 = vsel %vm296, %v291, 0.0
        %vm301 = vcmask 1041408
        %v302 = vsel %vm301, %v297, 0.0
        %v303 = vsel %vm301, %v298, 0.0
        %v304 = vadd.f32 %v302, %v303
        %v305 = vsel %vm301, %v299, 0.0
        %v306 = vadd.f32 %v304, %v305
        %v307 = vsel %vm301, %v300, 0.0
        %v308 = vadd.f32 %v306, %v307
        %p309 = scmp.eq.s32.totalorder %s28, 0
        // Predicated region
        $region41: #{tpu_custom_call.1} parent=31 // pred_check
          %p310 = pneg %p309
        $region42: #{tpu_custom_call.1} parent=31 // pred_check_branch
          %312 = sbr.rel (%p310) target = $region44
        $region43: #{tpu_custom_call.1} parent=31 // pred_region
          %313 = vst [vmem:[%s265] sm:$0x3] %v308
        $region44: #{tpu_custom_call.1} parent=31 // pred_fallthru
          _
        %p314 = scmp.ne.s32.totalorder %s28, 0
        // Predicated region
        $region45: #{tpu_custom_call.1} parent=31 // pred_check
          %p315 = pneg %p314
        $region46: #{tpu_custom_call.1} parent=31 // pred_check_branch
          %317 = sbr.rel (%p315) target = $region48
        $region47: #{tpu_custom_call.1} parent=31 // pred_region
          %v318 = vld [vmem:[%s265] sm:$0x3]
          %v319 = vadd.f32 %v318, %v308
          %320 = vst [vmem:[%s265] sm:$0x3] %v319
        $region48: #{tpu_custom_call.1} parent=31 // pred_fallthru
          _
        %s321 = sand.u32 %s127, 1
        %s322 = scalar_lea.sflag [#allocation4], %s321
        %s323 = sand.u32 %s127, 1
        %s324 = smul.addr %s323, 2
        %s325 = scalar_lea.vmem [#allocation7], %s324
        // Predicated region
        $region49: #{tpu_custom_call.1} parent=31 // pred_check
          %p326 = pneg %p137
        $region50: #{tpu_custom_call.1} parent=31 // pred_check_branch
          %328 = sbr.rel (%p326) target = $region52
        $region51: #{tpu_custom_call.1} parent=31 // pred_region
          %s330 = ssub.s32 32, 32
          %331 = vsyncadd %s322, %s330
          %s332 = smul.addr %s27, 32
          %s333 = scalar_lea.hbm %s3, %s332
          %s335 = sshll.u32 %s325, 4
          %s336 = int_to_ptr.vmem [resolvable:$true] %s335
          %338 = dma.vmem_to_hbm [thread:$0]  %s336, 32, %s333, %s322
        $region52: #{tpu_custom_call.1} parent=31 // pred_fallthru
          _
      $region32: #{tpu_custom_call.1} parent=5 // pred_fallthru
        _
      %p339 = scmp.le.s32.totalorder 2, %s18
      // Predicated region
      $region53: #{tpu_custom_call.1} parent=5 // pred_check
        %p340 = pneg %p339
      $region54: #{tpu_custom_call.1} parent=5 // pred_check_branch
        %342 = sbr.rel (%p340) target = $region56
      $region55: #{tpu_custom_call.1} parent=5 // pred_region
        %s343 = ssub.s32 %s18, 2
        // Predicated region
        $region57: #{tpu_custom_call.1} parent=55 // pred_check
          %p344 = pneg %p143
        $region58: #{tpu_custom_call.1} parent=55 // pred_check_branch
          %346 = sbr.rel (%p344) target = $region60
        $region59: #{tpu_custom_call.1} parent=55 // pred_region
          %s347 = sand.u32 %s128, 1
          %s348 = scalar_lea.sflag [#allocation4], %s347
          %s349 = sand.u32 %s128, 1
          %s350 = smul.addr %s349, 2
          %s351 = scalar_lea.vmem [#allocation7], %s350
          %352 = dma.done %s348, 32
        $region60: #{tpu_custom_call.1} parent=55 // pred_fallthru
          _
      $region56: #{tpu_custom_call.1} parent=5 // pred_fallthru
        _
    $region6: #{tpu_custom_call.1} parent=1 // loop_footer
      %s22 = sadd.s32 1, %s18
    $region7: #{tpu_custom_call.1} parent=1 // loop_footer_branch
      %17 = sbr.rel target = $region3
    $region8: #{tpu_custom_call.1} parent=1 // loop_exit
      _
    %353 = vsyncpa [#allocation3], 1
    %s354 = scalar_lea.sflag [#allocation3], 1
    %355 = vsyncpa %s354, 1
    %356 = vsyncpa [#allocation6], 1
    %s357 = scalar_lea.sflag [#allocation6], 1
    %358 = vsyncpa %s357, 1
    %359 = vsyncpa [#allocation4], 1
    %s360 = scalar_lea.sflag [#allocation4], 1
    %361 = vsyncpa %s360, 1

</llo_original>
